<compile_context>
chip_gen: v6e
topology: v6e:2x2x1
jax: 0.10.0
libtpu: 0.0.40
codegen_flags: <defaults>
</compile_context>

<pallas_src>
import functools

import jax
import jax.numpy as jnp
import numpy as np
from jax.experimental import pallas as pl
from jax.experimental.pallas import tpu as pltpu


def _pow_static(base, gamma):
    """base ** gamma, using explicit multiplies for small integer gamma."""
    g = float(gamma)
    if g.is_integer() and 0.0 <= g <= 8.0:
        gi = int(g)
        if gi == 0:
            return jnp.ones_like(base)
        out = base
        for _ in range(gi - 1):
            out = out * base
        return out
    return base ** jnp.float32(g)


def _focal_loss_kernel(x_ref, t_ref, out_ref, loss_acc, focal_acc, *,
                       gamma, n_valid, hw, block_n, reduction, normalized,
                       reduced_threshold, eps, needs_mask):
    b = pl.program_id(0)
    j = pl.program_id(1)

    @pl.when((b == 0) & (j == 0))
    def _():
        loss_acc[...] = jnp.zeros_like(loss_acc)
        focal_acc[...] = jnp.zeros_like(focal_acc)

    x = x_ref[0].astype(jnp.float32)          # (C, block_n) logits tile
    t = t_ref[0]                              # (1, block_n) int32 targets tile

    # softmax pieces over the class axis (axis 0) without materializing logp
    m = jnp.max(x, axis=0, keepdims=True)     # (1, block_n)
    z = x - m                                 # (C, block_n)
    ez = jnp.exp(z)                           # (C, block_n)
    sumexp = jnp.sum(ez, axis=0, keepdims=True)

    cls_ids = jax.lax.broadcasted_iota(jnp.int32, x.shape, 0)
    onehot = cls_ids == t                     # (C, block_n) bool
    z_t = jnp.sum(jnp.where(onehot, z, 0.0), axis=0, keepdims=True)
    ez_t = jnp.sum(jnp.where(onehot, ez, 0.0), axis=0, keepdims=True)

    nll = jnp.log(sumexp) - z_t               # (1, block_n)
    pt = ez_t / sumexp                        # == exp(-nll), reuses exp(z)

    if reduced_threshold is None:
        base = 1.0 - pt
        focal = _pow_static(base, gamma)
    else:
        base = (1.0 - pt) * jnp.float32(1.0 / reduced_threshold)
        focal = _pow_static(base, gamma)
        # both branches are finite (1-pt >= 0), so evaluating both is safe
        focal = jnp.where(pt < reduced_threshold, jnp.float32(1.0), focal)

    loss = focal * nll

    if needs_mask:
        last_j = pl.num_programs(1) - 1

        @pl.when(j == last_j)
        def _():
            # padded columns (beyond the true H*W extent) only exist in the
            # last HW tile of each batch row
            col = jax.lax.broadcasted_iota(jnp.int32, loss.shape, 1) + j * block_n
            valid = col < hw
            loss_acc[...] += jnp.where(valid, loss, 0.0)
            focal_acc[...] += jnp.where(valid, focal, 0.0)

        @pl.when(j != last_j)
        def _():
            loss_acc[...] += loss
            focal_acc[...] += focal
    else:
        loss_acc[...] += loss
        focal_acc[...] += focal

    @pl.when((b == pl.num_programs(0) - 1) & (j == pl.num_programs(1) - 1))
    def _():
        loss_sum = jnp.sum(loss_acc[...], axis=1, keepdims=True)   # (1, 1)
        if normalized:
            norm = jnp.maximum(
                jnp.sum(focal_acc[...], axis=1, keepdims=True), eps)
            loss_sum = loss_sum / norm
        if reduction == "mean":
            loss_sum = loss_sum / n_valid
        out_ref[...] = loss_sum


def cross_entropy_focal_loss(logits, targets, *, gamma=2.0, reduction="mean",
                             normalized=False, reduced_threshold=None,
                             eps=1e-6, block_n=2048):
    """logits: [B, C, H, W] float; targets: [B, H, W] int. Returns scalar."""
    assert reduction in ("mean", "sum"), "only 'mean'/'sum' supported in-kernel"
    B, C, H, W = logits.shape
    hw = H * W
    n_valid = B * hw

    # free, contiguous reshapes -- no transpose, no extra HBM pass
    x = logits.reshape(B, C, hw)
    # TODO(synk): targets could be narrowed to int16/int8 for small C to save
    # bandwidth; kept int32 for lowering robustness.
    t = targets.reshape(B, 1, hw).astype(jnp.int32)

    # lane tile: multiple of 128, clamped to the (128-rounded) HW extent
    hw_128 = ((hw + 127) // 128) * 128
    bn = min(int(block_n), hw_128)
    bn = max(128, (bn // 128) * 128)
    hw_pad = ((hw + bn - 1) // bn) * bn
    needs_mask = hw_pad != hw
    if needs_mask:
        x = jnp.pad(x, ((0, 0), (0, 0), (0, hw_pad - hw)))
        t = jnp.pad(t, ((0, 0), (0, 0), (0, hw_pad - hw)))
    n_hw_tiles = hw_pad // bn
    grid = (B, n_hw_tiles)

    # VMEM budget: double-buffered logits + targets tiles, plus accumulators.
    itemsize = jnp.dtype(logits.dtype).itemsize
    tile_bytes = C * bn * itemsize + bn * 4          # one input step
    needed = 2 * tile_bytes + 2 * bn * 4 + (4 << 20)  # dbl-buffer + acc + slack
    vmem_limit = int(min(100 * 1024 * 1024, max(needed * 2, 16 * 1024 * 1024)))

    out = pl.pallas_call(
        functools.partial(_focal_loss_kernel, gamma=gamma, n_valid=n_valid,
                          hw=hw, block_n=bn, reduction=reduction,
                          normalized=normalized,
                          reduced_threshold=reduced_threshold, eps=eps,
                          needs_mask=needs_mask),
        out_shape=jax.ShapeDtypeStruct((1, 1), jnp.float32),
        grid_spec=pltpu.PrefetchScalarGridSpec(
            num_scalar_prefetch=0,
            grid=grid,
            in_specs=[pl.BlockSpec((1, C, bn), lambda b, j: (b, 0, j)),
                      pl.BlockSpec((1, 1, bn), lambda b, j: (b, 0, j))],
            out_specs=pl.BlockSpec((1, 1), lambda b, j: (0, 0)),
            scratch_shapes=[pltpu.VMEM((1, bn), jnp.float32),
                            pltpu.VMEM((1, bn), jnp.float32)]),
        compiler_params=pltpu.CompilerParams(
            dimension_semantics=("arbitrary", "arbitrary"),
            vmem_limit_bytes=vmem_limit),
    )(x, t)
    return out[0, 0]


class CrossEntropyFocalLoss:
    """JAX/Pallas port of the PyTorch CrossEntropyFocalLoss module."""

    def __init__(self, gamma=2.0, reduction="mean", normalized=False,
                 reduced_threshold=None):
        self.gamma = gamma
        self.reduction = reduction
        self.normalized = normalized
        self.reduced_threshold = reduced_threshold

    def __call__(self, inputs, targets):
        return cross_entropy_focal_loss(
            inputs, targets, gamma=self.gamma, reduction=self.reduction,
            normalized=self.normalized,
            reduced_threshold=self.reduced_threshold)


def _reference_loss(logits, targets, gamma=2.0):
    # pure-JAX reference of the default-parameter forward (mean reduction)
    logp = jax.nn.log_softmax(logits, axis=1)                 # (B,C,H,W)
    nll = -jnp.take_along_axis(logp, targets[:, None], axis=1)[:, 0]
    pt = jnp.exp(-nll)
    loss = (1.0 - pt) ** gamma * nll
    return loss.mean()


if __name__ == "__main__":
    B, C, H, W = 2, 4, 16, 16
    key = jax.random.PRNGKey(0)
    k1, k2 = jax.random.split(key)
    logits = jax.random.normal(k1, (B, C, H, W), dtype=jnp.float32)
    targets = jax.random.randint(k2, (B, H, W), 0, C, dtype=jnp.int32)

    loss_fn = CrossEntropyFocalLoss(gamma=2.0, reduction="mean")
    loss = loss_fn(logits, targets)
    loss = jax.block_until_ready(loss)

    ref = jax.block_until_ready(_reference_loss(logits, targets, gamma=2.0))
    np.testing.assert_allclose(np.asarray(loss), np.asarray(ref),
                               rtol=2e-5, atol=1e-6)
    print("KERNEL_OK")
</pallas_src>

<mosaic_0001>
module attributes {stable_mosaic.version = 11 : i64} {
  func.func @_focal_loss_kernel(%arg0: i32, %arg1: i32, %arg2: memref<1x4x256xf32, #tpu.memory_space<vmem>>, %arg3: memref<1x1x256xi32, #tpu.memory_space<vmem>>, %arg4: memref<1x1xf32, #tpu.memory_space<vmem>>, %arg5: memref<1x256xf32, #tpu.memory_space<vmem>>, %arg6: memref<1x256xf32, #tpu.memory_space<vmem>>) attributes {dimension_semantics = [#tpu.dimension_semantics<arbitrary>, #tpu.dimension_semantics<arbitrary>], iteration_bounds = array<i64: 2, 1>, scalar_prefetch = 0 : i64, scratch_operands = 2 : i64, tpu.core_type = #tpu.core_type<tc>, window_params = [{transform_indices = @transform_0, window_bounds = array<i64: 1, 4, 256>}, {transform_indices = @transform_1, window_bounds = array<i64: 1, 1, 256>}, {pipeline_mode = #tpu.pipeline_mode<synchronous>, transform_indices = @transform_2, window_bounds = array<i64: 1, 1>}]} {
    %c0_i32 = arith.constant 0 : i32
    %0 = arith.cmpi eq, %arg0, %c0_i32 : i32
    %c0_i32_0 = arith.constant 0 : i32
    %1 = arith.cmpi eq, %arg1, %c0_i32_0 : i32
    %2 = arith.andi %0, %1 : i1
    %3 = arith.extui %2 : i1 to i32
    %c0_i32_1 = arith.constant 0 : i32
    %4 = arith.cmpi ne, %3, %c0_i32_1 : i32
    scf.if %4 {
      %cst_23 = arith.constant 0.000000e+00 : f32
      %45 = vector.broadcast %cst_23 : f32 to vector<1x256xf32>
      %c0_24 = arith.constant 0 : index
      %c0_25 = arith.constant 0 : index
      %46 = vector.load %arg5[%c0_24, %c0_25] : memref<1x256xf32, #tpu.memory_space<vmem>>, vector<1x256xf32>
      tpu.vector_store %arg5[%c0_24, %c0_25], %45 {strides = array<i32>} : memref<1x256xf32, #tpu.memory_space<vmem>>, vector<1x256xf32>,
      %cst_26 = arith.constant 0.000000e+00 : f32
      %47 = vector.broadcast %cst_26 : f32 to vector<1x256xf32>
      %c0_27 = arith.constant 0 : index
      %c0_28 = arith.constant 0 : index
      %48 = vector.load %arg6[%c0_27, %c0_28] : memref<1x256xf32, #tpu.memory_space<vmem>>, vector<1x256xf32>
      tpu.vector_store %arg6[%c0_27, %c0_28], %47 {strides = array<i32>} : memref<1x256xf32, #tpu.memory_space<vmem>>, vector<1x256xf32>,
    } else {
    }
    %c0 = arith.constant 0 : index
    %c0_2 = arith.constant 0 : index
    %c0_3 = arith.constant 0 : index
    %5 = vector.load %arg2[%c0, %c0_2, %c0_3] : memref<1x4x256xf32, #tpu.memory_space<vmem>>, vector<1x4x256xf32>
    %6 = vector.shape_cast %5 : vector<1x4x256xf32> to vector<4x256xf32>
    %c0_4 = arith.constant 0 : index
    %c0_5 = arith.constant 0 : index
    %c0_6 = arith.constant 0 : index
    %7 = vector.load %arg3[%c0_4, %c0_5, %c0_6] : memref<1x1x256xi32, #tpu.memory_space<vmem>>, vector<1x1x256xi32>
    %8 = vector.shape_cast %7 : vector<1x1x256xi32> to vector<1x256xi32>
    %cst = arith.constant dense<0xFF800000> : vector<256xf32>
    %9 = vector.multi_reduction <maximumf>, %6, %cst [0] : vector<4x256xf32> to vector<256xf32>
    %10 = vector.shape_cast %9 : vector<256xf32> to vector<1x256xf32>
    %11 = vector.broadcast %10 : vector<1x256xf32> to vector<4x256xf32>
    %12 = arith.subf %6, %11 : vector<4x256xf32>
    %13 = math.exp %12 : vector<4x256xf32>
    %cst_7 = arith.constant dense<0.000000e+00> : vector<256xf32>
    %14 = vector.multi_reduction <add>, %13, %cst_7 [0] : vector<4x256xf32> to vector<256xf32>
    %15 = vector.shape_cast %14 : vector<256xf32> to vector<1x256xf32>
    %16 = tpu.iota {dimensions = array<i32: 0>} : vector<4x256xi32>
    %17 = vector.broadcast %8 : vector<1x256xi32> to vector<4x256xi32>
    %18 = arith.cmpi eq, %16, %17 : vector<4x256xi32>
    %cst_8 = arith.constant 0.000000e+00 : f32
    %19 = vector.broadcast %cst_8 : f32 to vector<4x256xf32>
    %20 = arith.select %18, %12, %19 : vector<4x256xi1>, vector<4x256xf32>
    %cst_9 = arith.constant dense<0.000000e+00> : vector<256xf32>
    %21 = vector.multi_reduction <add>, %20, %cst_9 [0] : vector<4x256xf32> to vector<256xf32>
    %22 = vector.shape_cast %21 : vector<256xf32> to vector<1x256xf32>
    %cst_10 = arith.constant 0.000000e+00 : f32
    %23 = vector.broadcast %cst_10 : f32 to vector<4x256xf32>
    %24 = arith.select %18, %13, %23 : vector<4x256xi1>, vector<4x256xf32>
    %cst_11 = arith.constant dense<0.000000e+00> : vector<256xf32>
    %25 = vector.multi_reduction <add>, %24, %cst_11 [0] : vector<4x256xf32> to vector<256xf32>
    %26 = vector.shape_cast %25 : vector<256xf32> to vector<1x256xf32>
    %27 = math.log %15 : vector<1x256xf32>
    %28 = arith.subf %27, %22 : vector<1x256xf32>
    %29 = arith.divf %26, %15 : vector<1x256xf32>
    %cst_12 = arith.constant 1.000000e+00 : f32
    %30 = vector.broadcast %cst_12 : f32 to vector<1x256xf32>
    %31 = arith.subf %30, %29 : vector<1x256xf32>
    %32 = arith.mulf %31, %31 : vector<1x256xf32>
    %33 = arith.mulf %32, %28 : vector<1x256xf32>
    %c0_13 = arith.constant 0 : index
    %c0_14 = arith.constant 0 : index
    %34 = vector.load %arg5[%c0_13, %c0_14] : memref<1x256xf32, #tpu.memory_space<vmem>>, vector<1x256xf32>
    %35 = arith.addf %34, %33 : vector<1x256xf32>
    %c0_15 = arith.constant 0 : index
    %c0_16 = arith.constant 0 : index
    %36 = vector.load %arg5[%c0_15, %c0_16] : memref<1x256xf32, #tpu.memory_space<vmem>>, vector<1x256xf32>
    tpu.vector_store %arg5[%c0_15, %c0_16], %35 {strides = array<i32>} : memref<1x256xf32, #tpu.memory_space<vmem>>, vector<1x256xf32>,
    %c0_17 = arith.constant 0 : index
    %c0_18 = arith.constant 0 : index
    %37 = vector.load %arg6[%c0_17, %c0_18] : memref<1x256xf32, #tpu.memory_space<vmem>>, vector<1x256xf32>
    %38 = arith.addf %37, %32 : vector<1x256xf32>
    %c0_19 = arith.constant 0 : index
    %c0_20 = arith.constant 0 : index
    %39 = vector.load %arg6[%c0_19, %c0_20] : memref<1x256xf32, #tpu.memory_space<vmem>>, vector<1x256xf32>
    tpu.vector_store %arg6[%c0_19, %c0_20], %38 {strides = array<i32>} : memref<1x256xf32, #tpu.memory_space<vmem>>, vector<1x256xf32>,
    %c1_i32 = arith.constant 1 : i32
    %40 = arith.cmpi eq, %arg0, %c1_i32 : i32
    %c0_i32_21 = arith.constant 0 : i32
    %41 = arith.cmpi eq, %arg1, %c0_i32_21 : i32
    %42 = arith.andi %40, %41 : i1
    %43 = arith.extui %42 : i1 to i32
    %c0_i32_22 = arith.constant 0 : i32
    %44 = arith.cmpi ne, %43, %c0_i32_22 : i32
    scf.if %44 {
      %c0_23 = arith.constant 0 : index
      %c0_24 = arith.constant 0 : index
      %45 = vector.load %arg5[%c0_23, %c0_24] : memref<1x256xf32, #tpu.memory_space<vmem>>, vector<1x256xf32>
      %cst_25 = arith.constant dense<0.000000e+00> : vector<1xf32>
      %46 = vector.multi_reduction <add>, %45, %cst_25 [1] : vector<1x256xf32> to vector<1xf32>
      %47 = vector.shape_cast %46 : vector<1xf32> to vector<1x1xf32>
      %cst_26 = arith.constant 5.120000e+02 : f32
      %48 = vector.broadcast %cst_26 : f32 to vector<1x1xf32>
      %49 = arith.divf %47, %48 : vector<1x1xf32>
      %c0_27 = arith.constant 0 : index
      %c0_28 = arith.constant 0 : index
      %50 = vector.load %arg4[%c0_27, %c0_28] : memref<1x1xf32, #tpu.memory_space<vmem>>, vector<1x1xf32>
      tpu.vector_store %arg4[%c0_27, %c0_28], %49 {strides = array<i32>} : memref<1x1xf32, #tpu.memory_space<vmem>>, vector<1x1xf32>,
    } else {
    }
    return
  }
  func.func @transform_0(%arg0: i32, %arg1: i32) -> (i32, i32, i32) {
    %c0_i32 = arith.constant 0 : i32
    %c0_i32_0 = arith.constant 0 : i32
    return %arg0, %c0_i32, %arg1 : i32, i32, i32
  }
  func.func @transform_1(%arg0: i32, %arg1: i32) -> (i32, i32, i32) {
    %c0_i32 = arith.constant 0 : i32
    %c0_i32_0 = arith.constant 0 : i32
    return %arg0, %c0_i32, %arg1 : i32, i32, i32
  }
  func.func @transform_2(%arg0: i32, %arg1: i32) -> (i32, i32) {
    %c0_i32 = arith.constant 0 : i32
    %c0_i32_0 = arith.constant 0 : i32
    %c0_i32_1 = arith.constant 0 : i32
    return %c0_i32, %c0_i32_0 : i32, i32
  }
}

</mosaic_0001>

<llo_original>
// kernel: tpu_custom_call.1
$region0: #{tpu_custom_call.1}
  #allocation0 [shape = 'u32[]', space=smem, size = 0x4, offset = 0x4, fixed_abs, tag = 'smem constant byte address 0x4 - core index']
  #allocation1 [shape = 'u32[144,128]{1,0:T(1,128)}', space=vmem, size = 0x12000, scoped, tag = 'internal scratch']
  #allocation2 [shape = 'f32[1,256]{1,0:T(1,128)}', space=vmem, size = 0x400, scoped, tag = 'scratch operand']
  #allocation3 [shape = 'f32[1,256]{1,0:T(1,128)}', space=vmem, size = 0x400, scoped, tag = 'scratch operand']
  %s0 = inlined_call_operand.hbm [shape: f32[2,4,256], index: 0, kind: input, shape index: {}]
  %s1 = inlined_call_operand.hbm [shape: s32[2,1,256], index: 1, kind: input, shape index: {}]
  %s2 = inlined_call_operand.hbm [shape: f32[1,1], index: 2, kind: output, shape index: {}]
  %s3 = sld [smem:[#allocation0]]
  $region57: #{tpu_custom_call.1} parent=0
    _
  %s5 = ssub.s32 1, %s3
  %s6 = scalar_select 0, %s5, %s3
  $region1: #{tpu_custom_call.1} parent=0
    #allocation4 [shape = 'u8[8192]{0}', space=vmem, size = 0x2000, scoped, tag = 'input window, operand 0']
    #allocation5 [shape = 's32[2]{0}', space=sflag, size = 0x8, scoped, tag = 'scoped memory for tpu_custom_call.1']
    #allocation6 [shape = 's32[2]{0}', space=sflag, size = 0x8, scoped, tag = 'scoped memory for tpu_custom_call.1']
    #allocation7 [shape = 'u8[2048]{0}', space=vmem, size = 0x800, scoped, tag = 'input window, operand 1']
    #allocation8 [shape = 's32[2]{0}', space=sflag, size = 0x8, scoped, tag = 'scoped memory for tpu_custom_call.1']
    #allocation9 [shape = 'u8[512]{0}', space=vmem, size = 0x400, scoped, tag = 'output window, operand 0, single buffered']
    %7 = vsyncpa [#allocation5], 0
    %s8 = scalar_lea.sflag [#allocation5], 1
    %9 = vsyncpa %s8, 0
    %10 = vsyncpa [#allocation8], 0
    %s11 = scalar_lea.sflag [#allocation8], 1
    %12 = vsyncpa %s11, 0
    %13 = vsyncpa [#allocation6], 0
    loop: start=0, step=1, limit=4
    $region2: #{tpu_custom_call.1} parent=1 // loop_pre_header
      _
    $region3: #{tpu_custom_call.1} parent=1 // loop_header
      %s15 = sphi 0, %s19
      %p16 = scmp.ge.s32.totalorder %s15, 4
      %s22 = sphi 0, %s34
      %s23 = sphi 0, %s30
      %s24 = sphi 0, %s22
      %s25 = sphi 0, %s23
      %s26 = sphi 0, %s24
      %s27 = sphi 0, %s25
      %s39 = sphi 0, %s41
      %s42 = sphi 0, %s39
      %s43 = sphi 0, %s42
      %s59 = sphi 0, %s43
      %s67 = sphi 0, %s69
      %s70 = sphi 0, %s67
      %s71 = sphi 0, %s70
      %s87 = sphi 0, %s71
      %s91 = sphi 0, %s91
      %s93 = sphi 0, %s91
      %s94 = sphi 0, %s93
      %s108 = sphi 0, %s94
    $region4: #{tpu_custom_call.1} parent=1 // loop_header_branch
      %18 = sbr.rel (%p16) target = $region8
    $region5: #{tpu_custom_call.1} parent=1 // loop_body
      %s20 = ssub.s32 %s15, 1
      %s21 = ssub.s32 %s15, 2
      %s28 = sadd.s32 1, %s23
      %p29 = scmp.ge.s32.totalorder %s28, 1
      %s30 = scalar_select %p29, 0, %s28
      %s31 = sadd.s32 1, %s22
      %s32 = scalar_select %p29, %s31, %s22
      %p33 = scmp.ge.s32.totalorder %s32, 2
      %s34 = scalar_select %p33, 0, %s32
      %s35 = ssub.s32 %s22, %s34
      %s36 = ssub.s32 %s23, %s30
      %s37 = sor.u32 %s35, %s36
      %p38 = scmp.eq.s32.totalorder %s37, 0
      %s40 = sadd.s32 %s39, 1
      %s41 = scalar_select %p38, %s39, %s40
      %p44 = pneg %p38
      %p45 = scmp.eq.s32.totalorder %s15, 1
      %p46 = por %p44, %p45
      %p47 = scmp.ne.s32.totalorder %s39, %s42
      %p48 = scmp.eq.s32.totalorder %s15, 0
      %p49 = por %p47, %p48
      %p50 = scmp.ne.s32.totalorder %s39, %s42
      %p51 = scmp.eq.s32.totalorder %s20, 1
      %p52 = por %p50, %p51
      %p53 = scmp.ne.s32.totalorder %s42, %s43
      %p54 = scmp.eq.s32.totalorder %s20, 0
      %p55 = por %p53, %p54
      %p56 = scmp.ne.s32.totalorder %s42, %s43
      %p57 = scmp.eq.s32.totalorder %s21, 1
      %p58 = por %p56, %p57
      %p60 = scmp.ne.s32.totalorder %s43, %s59
      %p61 = scmp.eq.s32.totalorder %s21, 0
      %p62 = por %p60, %p61
      %s63 = ssub.s32 %s22, %s34
      %s64 = ssub.s32 %s23, %s30
      %s65 = sor.u32 %s63, %s64
      %p66 = scmp.eq.s32.totalorder %s65, 0
      %s68 = sadd.s32 %s67, 1
      %s69 = scalar_select %p66, %s67, %s68
      %p72 = pneg %p66
      %p73 = scmp.eq.s32.totalorder %s15, 1
      %p74 = por %p72, %p73
      %p75 = scmp.ne.s32.totalorder %s67, %s70
      %p76 = scmp.eq.s32.totalorder %s15, 0
      %p77 = por %p75, %p76
      %p78 = scmp.ne.s32.totalorder %s67, %s70
      %p79 = scmp.eq.s32.totalorder %s20, 1
      %p80 = por %p78, %p79
      %p81 = scmp.ne.s32.totalorder %s70, %s71
      %p82 = scmp.eq.s32.totalorder %s20, 0
      %p83 = por %p81, %p82
      %p84 = scmp.ne.s32.totalorder %s70, %s71
      %p85 = scmp.eq.s32.totalorder %s21, 1
      %p86 = por %p84, %p85
      %p88 = scmp.ne.s32.totalorder %s71, %s87
      %p89 = scmp.eq.s32.totalorder %s21, 0
      %p90 = por %p88, %p89
      %s92 = sadd.s32 %s91, 1
      %p95 = scmp.eq.s32.totalorder %s15, 1
      %p96 = scmp.ne.s32.totalorder %s91, %s93
      %p97 = scmp.eq.s32.totalorder %s15, 0
      %p98 = por %p96, %p97
      %p99 = scmp.ne.s32.totalorder %s91, %s93
      %p100 = scmp.eq.s32.totalorder %s20, 1
      %p101 = por %p99, %p100
      %p102 = scmp.ne.s32.totalorder %s93, %s94
      %p103 = scmp.eq.s32.totalorder %s20, 0
      %p104 = por %p102, %p103
      %p105 = scmp.ne.s32.totalorder %s93, %s94
      %p106 = scmp.eq.s32.totalorder %s21, 1
      %p107 = por %p105, %p106
      %p109 = scmp.ne.s32.totalorder %s94, %s108
      %p110 = scmp.eq.s32.totalorder %s21, 0
      %p111 = por %p109, %p110
      %p112 = scmp.le.s32.totalorder 1, %s15
      %p113 = scmp.lt.s32.totalorder %s15, 3
      %p114 = pnand %p112, %p113
      %p115 = pneg %p114
      // Predicated region
      $region9: #{tpu_custom_call.1} parent=5 // pred_check
        _
      $region10: #{tpu_custom_call.1} parent=5 // pred_check_branch
        %117 = sbr.rel (%p114) target = $region12
      $region11: #{tpu_custom_call.1} parent=5 // pred_region
        %s118 = ssub.s32 %s15, 1
      $region12: #{tpu_custom_call.1} parent=5 // pred_fallthru
        _
      %p119 = scmp.lt.s32.totalorder %s15, 2
      // Predicated region
      $region13: #{tpu_custom_call.1} parent=5 // pred_check
        %p120 = pneg %p119
      $region14: #{tpu_custom_call.1} parent=5 // pred_check_branch
        %122 = sbr.rel (%p120) target = $region16
      $region15: #{tpu_custom_call.1} parent=5 // pred_region
        // Predicated region
        $region17: #{tpu_custom_call.1} parent=15 // pred_check
          %p123 = pneg %p49
        $region18: #{tpu_custom_call.1} parent=15 // pred_check_branch
          %125 = sbr.rel (%p123) target = $region20
        $region19: #{tpu_custom_call.1} parent=15 // pred_region
          %s126 = sand.u32 %s39, 1
          %s127 = scalar_lea.sflag [#allocation5], %s126
          %s128 = sand.u32 %s39, 1
          %s129 = smul.addr %s128, 8
          %s130 = scalar_lea.vmem [#allocation4], %s129
          %s131 = smul.u32 2, %s23
          %s133 = ssub.s32 128, 128
          %134 = vsyncadd %s127, %s133
          %s135 = smul.addr %s22, 2
          %s136 = sadd.s32 %s131, %s135
          %s137 = smul.addr %s136, 64
          %s138 = scalar_lea.hbm %s0, %s137
          %s140 = sshll.u32 %s130, 4
          %s141 = int_to_ptr.vmem [resolvable:$true] %s140
          %143 = dma.hbm_to_vmem [thread:$0]  %s138, 128, %s141, %s127
        $region20: #{tpu_custom_call.1} parent=15 // pred_fallthru
          _
        // Predicated region
        $region21: #{tpu_custom_call.1} parent=15 // pred_check
          %p144 = pneg %p77
        $region22: #{tpu_custom_call.1} parent=15 // pred_check_branch
          %146 = sbr.rel (%p144) target = $region24
        $region23: #{tpu_custom_call.1} parent=15 // pred_region
          %s147 = sand.u32 %s67, 1
          %s148 = scalar_lea.sflag [#allocation8], %s147
          %s149 = sand.u32 %s67, 1
          %s150 = smul.addr %s149, 2
          %s151 = scalar_lea.vmem [#allocation7], %s150
          %s152 = smul.u32 2, %s23
          %s154 = ssub.s32 32, 32
          %155 = vsyncadd %s148, %s154
          %s156 = smul.addr %s22, 2
          %s157 = sadd.s32 %s152, %s156
          %s158 = smul.addr %s157, 16
          %s159 = scalar_lea.hbm %s1, %s158
          %s161 = sshll.u32 %s151, 4
          %s162 = int_to_ptr.vmem [resolvable:$true] %s161
          %164 = dma.hbm_to_vmem [thread:$0]  %s159, 32, %s162, %s148
        $region24: #{tpu_custom_call.1} parent=15 // pred_fallthru
          _
      $region16: #{tpu_custom_call.1} parent=5 // pred_fallthru
        _
      %p165 = scmp.le.s32.totalorder 1, %s15
      %p166 = scmp.lt.s32.totalorder %s15, 3
      %p167 = pnand %p165, %p166
      %p168 = pneg %p167
      // Predicated region
      $region25: #{tpu_custom_call.1} parent=5 // pred_check
        _
      $region26: #{tpu_custom_call.1} parent=5 // pred_check_branch
        %170 = sbr.rel (%p167) target = $region28
      $region27: #{tpu_custom_call.1} parent=5 // pred_region
        %s171 = ssub.s32 %s15, 1
        %s172 = sand.u32 %s42, 1
        %s173 = scalar_lea.sflag [#allocation5], %s172
        %s174 = sand.u32 %s42, 1
        %s175 = smul.addr %s174, 8
        %s176 = scalar_lea.vmem [#allocation4], %s175
        // Predicated region
        $region29: #{tpu_custom_call.1} parent=27 // pred_check
          %p177 = pneg %p55
        $region30: #{tpu_custom_call.1} parent=27 // pred_check_branch
          %179 = sbr.rel (%p177) target = $region32
        $region31: #{tpu_custom_call.1} parent=27 // pred_region
          %180 = dma.done %s173, 128
        $region32: #{tpu_custom_call.1} parent=27 // pred_fallthru
          _
        %s181 = sand.u32 %s70, 1
        %s182 = scalar_lea.sflag [#allocation8], %s181
        %s183 = sand.u32 %s70, 1
        %s184 = smul.addr %s183, 2
        %s185 = scalar_lea.vmem [#allocation7], %s184
        // Predicated region
        $region33: #{tpu_custom_call.1} parent=27 // pred_check
          %p186 = pneg %p83
        $region34: #{tpu_custom_call.1} parent=27 // pred_check_branch
          %188 = sbr.rel (%p186) target = $region36
        $region35: #{tpu_custom_call.1} parent=27 // pred_region
          %189 = dma.done %s182, 32
        $region36: #{tpu_custom_call.1} parent=27 // pred_fallthru
          _
        %s190 = sand.u32 %s42, 1
        %s191 = scalar_lea.sflag [#allocation5], %s190
        %s192 = sand.u32 %s42, 1
        %s193 = smul.addr %s192, 8
        %s194 = scalar_lea.vmem [#allocation4], %s193
        %p195 = pneg %p55
        %p196 = pneg %p52
        %s197 = sand.u32 %s70, 1
        %s198 = scalar_lea.sflag [#allocation8], %s197
        %s199 = sand.u32 %s70, 1
        %s200 = smul.addr %s199, 2
        %s201 = scalar_lea.vmem [#allocation7], %s200
        %p202 = pneg %p83
        %p203 = pneg %p80
        %p204 = pneg %p104
        %p205 = pneg %p101
        %s206 = smul.u32 2, %s25
        %s207 = smul.u32 2, %s25
        %p208 = scmp.eq.s32.totalorder %s24, 0
        %p209 = scmp.eq.s32.totalorder %s25, 0
        %p210 = pnand %p208, %p209
        %p211 = pneg %p210
        // Predicated region
        $region37: #{tpu_custom_call.1} parent=27 // pred_check
          _
        $region38: #{tpu_custom_call.1} parent=27 // pred_check_branch
          %213 = sbr.rel (%p210) target = $region40
        $region39: #{tpu_custom_call.1} parent=27 // pred_region
          %v214 = vlaneseq
          %vm215 = vcmp.ge.s32.totalorder %v214, 0
          %vm216 = vcmp.lt.s32.totalorder %v214, 256
          %vm217 = vmand %vm215, %vm216
          %218 = vst.msk [vmem:[#allocation2] sm:$0x3] %vm217, 0.0
          %219 = vst.msk [vmem:[#allocation3] sm:$0x3] %vm217, 0.0
        $region40: #{tpu_custom_call.1} parent=27 // pred_fallthru
          _
        %v220 = vld [vmem:[%s176] sm:$0xff]
        %v221 = vld [vmem:[%s185] sm:$0x3]
        %v223 = vcombine.high %v220, %v220
        %vm225 = vcmask 1043456
        %v226 = vsel %vm225, %v220, -inf
        %v227 = vrot.slane %v226, 4
        %v228 = vmax.f32 %v226, %v227
        %v229 = vrot.slane %v228, 2
        %v230 = vmax.f32 %v228, %v229
        %v231 = vrot.slane %v230, 1
        %v232 = vmax.f32 %v230, %v231
        %v233 = vsel %vm225, %v223, -inf
        %v234 = vrot.slane %v233, 4
        %v235 = vmax.f32 %v233, %v234
        %v236 = vrot.slane %v235, 2
        %v237 = vmax.f32 %v235, %v236
        %v238 = vrot.slane %v237, 1
        %v239 = vmax.f32 %v237, %v238
        %v242 = vcombine.low %v232, %v239
        %v244 = vsub.f32 %v220, %v242
        %v245 = vmul.f32 %v244, 1.442695
        %v246 = vpow.pop %v245
        %v248 = vcombine.high %v246, %v246
        %v250 = vsel %vm225, %v246, 0.0
        %v251 = vrot.slane %v250, 4
        %v252 = vadd.f32 %v250, %v251
        %v253 = vrot.slane %v252, 2
        %v254 = vadd.f32 %v252, %v253
        %v255 = vrot.slane %v254, 1
        %v256 = vadd.f32 %v254, %v255
        %v257 = vsel %vm225, %v248, 0.0
        %v258 = vrot.slane %v257, 4
        %v259 = vadd.f32 %v257, %v258
        %v260 = vrot.slane %v259, 2
        %v261 = vadd.f32 %v259, %v260
        %v262 = vrot.slane %v261, 1
        %v263 = vadd.f32 %v261, %v262
        %v264 = vlaneseq
        %v265 = vshrl.u32 %v264, 7
        %v266 = vlaneseq
        %v267 = vshrl.u32 %v266, 7
        %v268 = vsub.s32 0, %v267
        %v269 = vrot.slane %v221, %v268
        %v270 = vlaneseq
        %v271 = vshrl.u32 %v270, 7
        %v272 = vsub.s32 1, %v271
        %v273 = vrot.slane %v221, %v272
        %vm274 = vcmp.eq.s32.totalorder %v265, %v269
        %vm275 = vcmp.eq.s32.totalorder %v265, %v273
        %v277 = vcombine.high %v244, %v244
        %v279 = vsel %vm274, %v244, 0.0
        %v280 = vsel %vm275, %v277, 0.0
        %v281 = vsel %vm225, %v279, 0.0
        %v282 = vrot.slane %v281, 4
        %v283 = vadd.f32 %v281, %v282
        %v284 = vrot.slane %v283, 2
        %v285 = vadd.f32 %v283, %v284
        %v286 = vrot.slane %v285, 1
        %v287 = vadd.f32 %v285, %v286
        %v288 = vsel %vm225, %v280, 0.0
        %v289 = vrot.slane %v288, 4
        %v290 = vadd.f32 %v288, %v289
        %v291 = vrot.slane %v290, 2
        %v292 = vadd.f32 %v290, %v291
        %v293 = vrot.slane %v292, 1
        %v294 = vadd.f32 %v292, %v293
        %v295 = vsel %vm274, %v246, 0.0
        %v296 = vsel %vm275, %v248, 0.0
        %v297 = vsel %vm225, %v295, 0.0
        %v298 = vrot.slane %v297, 4
        %v299 = vadd.f32 %v297, %v298
        %v300 = vrot.slane %v299, 2
        %v301 = vadd.f32 %v299, %v300
        %v302 = vrot.slane %v301, 1
        %v303 = vadd.f32 %v301, %v302
        %v304 = vsel %vm225, %v296, 0.0
        %v305 = vrot.slane %v304, 4
        %v306 = vadd.f32 %v304, %v305
        %v307 = vrot.slane %v306, 2
        %v308 = vadd.f32 %v306, %v307
        %v309 = vrot.slane %v308, 1
        %v310 = vadd.f32 %v308, %v309
        %v311 = vlog2.pop %v256
        %v312 = vmul.f32 %v311, 0.6931472
        %v313 = vlog2.pop %v263
        %v314 = vmul.f32 %v313, 0.6931472
        %v315 = vsub.f32 %v312, %v287
        %v316 = vsub.f32 %v314, %v294
        %v317 = vrcp.pop %v256
        %v318 = vmul.f32 %v303, %v317
        %v319 = vrcp.pop %v263
        %v320 = vmul.f32 %v310, %v319
        %v321 = vsub.f32 1.0, %v318
        %v322 = vsub.f32 1.0, %v320
        %v323 = vmul.f32 %v321, %v321
        %v324 = vmul.f32 %v322, %v322
        %v325 = vmul.f32 %v323, %v315
        %v326 = vmul.f32 %v324, %v316
        %v327 = vld [vmem:[#allocation2] sm:$0x3]
        %v330 = vcombine.low %v325, %v326
        %v332 = vunpack.c.l.s4 1966171168
        %v333 = vunpack.c.0.s8 %v332
        %v334 = vlaneseq
        %v335 = vshrl.u32 %v334, 7
        %v336 = vsub.s32 %v333, %v335
        %v337 = vrot.slane %v330, %v336
        %v339 = vunpack.c.l.s4 1966171168
        %v340 = vunpack.c.0.s8 %v339
        %v341 = vlaneseq
        %v342 = vshrl.u32 %v341, 7
        %v343 = vsub.s32 %v340, %v342
        %v344 = vrot.slane %v337, %v343
        %v346 = vadd.f32 %v327, %v344
        %v347 = vlaneseq
        %vm348 = vcmp.ge.s32.totalorder %v347, 0
        %vm349 = vcmp.lt.s32.totalorder %v347, 256
        %vm350 = vmand %vm348, %vm349
        %351 = vst.msk [vmem:[#allocation2] sm:$0x3] %vm350, %v346
        %v352 = vld [vmem:[#allocation3] sm:$0x3]
        %v355 = vcombine.low %v323, %v324
        %v357 = vunpack.c.l.s4 1966171168
        %v358 = vunpack.c.0.s8 %v357
        %v359 = vlaneseq
        %v360 = vshrl.u32 %v359, 7
        %v361 = vsub.s32 %v358, %v360
        %v362 = vrot.slane %v355, %v361
        %v364 = vunpack.c.l.s4 1966171168
        %v365 = vunpack.c.0.s8 %v364
        %v366 = vlaneseq
        %v367 = vshrl.u32 %v366, 7
        %v368 = vsub.s32 %v365, %v367
        %v369 = vrot.slane %v362, %v368
        %v371 = vadd.f32 %v352, %v369
        %372 = vst.msk [vmem:[#allocation3] sm:$0x3] %vm350, %v371
        %p373 = scmp.eq.s32.totalorder %s24, 1
        %p374 = pnand %p373, %p209
        %p375 = pneg %p374
        // Predicated region
        $region41: #{tpu_custom_call.1} parent=27 // pred_check
          _
        $region42: #{tpu_custom_call.1} parent=27 // pred_check_branch
          %377 = sbr.rel (%p374) target = $region44
        $region43: #{tpu_custom_call.1} parent=27 // pred_region
          %v378 = vld [vmem:[#allocation2] sm:$0x3]
          %v380 = vlaneseq
          %v381 = vshrl.u32 %v380, 7
          %v382 = vsub.s32 0, %v381
          %v383 = vrot.slane %v378, %v382
          %v384 = vlaneseq
          %v385 = vshrl.u32 %v384, 7
          %v386 = vsub.s32 1, %v385
          %v387 = vrot.slane %v378, %v386
          %vm390 = vcmask 1040384
          %v391 = vsel %vm390, %v383, 0.0
          %v392 = vsel %vm390, %v387, 0.0
          %v393 = vadd.f32 %v391, %v392
          %394 = vadd.xlane.f32.xlu0 %v393
          %v395 = vpop.xlane.xlu0 %394
          %v396 = vrcp.pop 512.0
          %v397 = vmul.f32 %v395, %v396
          %vm398 = vcmask 0
          %399 = vst.msk [vmem:[#allocation9] sm:$0x1] %vm398, %v397
        $region44: #{tpu_custom_call.1} parent=27 // pred_fallthru
          _
        // Predicated region
        $region45: #{tpu_custom_call.1} parent=27 // pred_check
          %p400 = pneg %p101
        $region46: #{tpu_custom_call.1} parent=27 // pred_check_branch
          %402 = sbr.rel (%p400) target = $region48
        $region47: #{tpu_custom_call.1} parent=27 // pred_region
          %s404 = ssub.s32 16, 16
          %405 = vsyncadd [#allocation6], %s404
          %s407 = sshll.u32 [#allocation9], 4
          %s408 = int_to_ptr.vmem [resolvable:$true] %s407
          %410 = dma.vmem_to_hbm [thread:$0]  %s408, 16, %s2, [#allocation6]
        $region48: #{tpu_custom_call.1} parent=27 // pred_fallthru
          _
        // Predicated region
        $region49: #{tpu_custom_call.1} parent=27 // pred_check
          %p411 = pneg %p101
        $region50: #{tpu_custom_call.1} parent=27 // pred_check_branch
          %413 = sbr.rel (%p411) target = $region52
        $region51: #{tpu_custom_call.1} parent=27 // pred_region
          %414 = dma.done [#allocation6], 16
        $region52: #{tpu_custom_call.1} parent=27 // pred_fallthru
          _
      $region28: #{tpu_custom_call.1} parent=5 // pred_fallthru
        _
      %p415 = scmp.le.s32.totalorder 2, %s15
      // Predicated region
      $region53: #{tpu_custom_call.1} parent=5 // pred_check
        %p416 = pneg %p415
      $region54: #{tpu_custom_call.1} parent=5 // pred_check_branch
        %418 = sbr.rel (%p416) target = $region56
      $region55: #{tpu_custom_call.1} parent=5 // pred_region
        %s419 = ssub.s32 %s15, 2
      $region56: #{tpu_custom_call.1} parent=5 // pred_fallthru
        _
    $region6: #{tpu_custom_call.1} parent=1 // loop_footer
      %s19 = sadd.s32 1, %s15
    $region7: #{tpu_custom_call.1} parent=1 // loop_footer_branch
      %14 = sbr.rel target = $region3
    $region8: #{tpu_custom_call.1} parent=1 // loop_exit
      _
    %420 = vsyncpa [#allocation5], 1
    %s421 = scalar_lea.sflag [#allocation5], 1
    %422 = vsyncpa %s421, 1
    %423 = vsyncpa [#allocation8], 1
    %s424 = scalar_lea.sflag [#allocation8], 1
    %425 = vsyncpa %s424, 1
    %426 = vsyncpa [#allocation6], 1
    %s427 = scalar_lea.sflag [#allocation6], 1
    %428 = vsyncpa %s427, 1

</llo_original>
